<compile_context>
chip_gen: v7x
topology: tpu7x:2x2x1
jax: 0.10.0
libtpu: 0.0.40
codegen_flags: <defaults>
</compile_context>

<pallas_src>
import functools

import jax
import jax.numpy as jnp
from jax import lax
from jax.experimental import pallas as pl
from jax.experimental.pallas import tpu as pltpu

GAMMA = 1.5
ALPHA = 0.25

_LANES = 128


def _round_up(x, m):
    return ((x + m - 1) // m) * m


def _modulating(z, gamma):
    if gamma == 1.5:
        return z * jnp.sqrt(z)          # z**1.5 without log+exp
    if gamma == 2.0:
        return z * z
    if gamma == 1.0:
        return z
    if gamma == 0.0:
        return jnp.ones_like(z)
    return z ** gamma                   # generic path (2 extra EUP ops)


def _focal_kernel(pred_ref, true_ref, out_ref, *, gamma, alpha, block_rows,
                  rows_in_last, ragged_last):
    x = pred_ref[...].astype(jnp.float32)
    y = true_ref[...].astype(jnp.float32)

    # exp(-|x|) computed once, reused for the stable BCE log term and sigmoid.
    e = jnp.exp(-jnp.abs(x))

    # Stable BCE with logits: max(x,0) - x*y + log(1 + exp(-|x|))
    bce = jnp.maximum(x, 0.0) - x * y + jnp.log1p(e)

    # sigmoid(x) = where(x>=0, 1, e) / (1 + e); divide -> approx recip +
    # one Newton refinement step (rides the VPU, EUP pushes cut).
    d = 1.0 + e
    r = pl.reciprocal(d, approx=True)
    r = r * (2.0 - d * r)
    p = jnp.where(x >= 0.0, 1.0, e) * r

    # z = 1 - p_t = p + y - 2*p*y   (p_t never formed)
    z = p + y - 2.0 * (p * y)
    # alpha_factor = y*alpha + (1-y)*(1-alpha) = (1-alpha) + y*(2*alpha-1)
    alpha_factor = (1.0 - alpha) + y * (2.0 * alpha - 1.0)

    loss = bce * alpha_factor * _modulating(z, gamma)   # (block_rows, 128)

    def _partial(v):
        # (block_rows, 128) -> (8, 128) lane-dense partial sum (pure VPU adds).
        return v.reshape(block_rows // 8, 8, _LANES).sum(axis=0)

    if ragged_last:
        is_last = pl.program_id(0) == pl.num_programs(0) - 1

        @pl.when(jnp.logical_not(is_last))
        def _():
            out_ref[...] = _partial(loss)

        @pl.when(is_last)
        def _():
            # Row-level mask, only on the (single) ragged trailing block.
            row = lax.broadcasted_iota(jnp.int32, (block_rows, _LANES), 0)
            out_ref[...] = _partial(jnp.where(row < rows_in_last, loss, 0.0))
    else:
        out_ref[...] = _partial(loss)


def _focal_elementwise(x, y, gamma, alpha):
    """Plain-jnp focal loss (used only for the <128-element tail)."""
    x = x.astype(jnp.float32)
    y = y.astype(jnp.float32)
    bce = jnp.maximum(x, 0.0) - x * y + jnp.log1p(jnp.exp(-jnp.abs(x)))
    p = jax.nn.sigmoid(x)
    z = p + y - 2.0 * p * y
    a_f = (1.0 - alpha) + y * (2.0 * alpha - 1.0)
    return bce * a_f * z ** gamma


def focal_loss(pred, true, gamma=GAMMA, alpha=ALPHA, *, block_rows=4096):
    """Focal loss with mean reduction over arbitrary-shaped logits/targets.

    Inputs may be f32 or bf16 (feed bf16 from the producer on HBM-bound chips;
    the kernel upcasts to f32 internally).
    """
    assert pred.shape == true.shape
    n_elem = pred.size

    pred_flat = pred.reshape(-1)
    true_flat = true.reshape(-1)

    rows = n_elem // _LANES
    tail = n_elem - rows * _LANES

    total = jnp.float32(0.0)
    if tail:
        # <128 leftover elements: a few lines of plain jnp, no padding pass.
        total = total + jnp.sum(
            _focal_elementwise(pred_flat[rows * _LANES:],
                               true_flat[rows * _LANES:], gamma, alpha))
    if rows == 0:
        return total / jnp.float32(n_elem)

    # Clamp tile: <= ~24 MiB of in-flight (double-buffered) input per core,
    # safe on v7x's 64 MiB VMEM; round to sublane multiple.
    in_bytes = pred.dtype.itemsize + true.dtype.itemsize
    max_rows = (24 * 1024 * 1024) // (_LANES * in_bytes * 2)
    block_rows = max(8, min(_round_up(block_rows, 8),
                            _round_up(rows, 8),
                            _round_up(max_rows, 8)))
    grid = pl.cdiv(rows, block_rows)
    rows_in_last = rows - (grid - 1) * block_rows
    ragged_last = rows_in_last != block_rows

    if tail:
        pred_main = pred_flat[: rows * _LANES]
        true_main = true_flat[: rows * _LANES]
    else:  # no slice op at all in the aligned (common) case
        pred_main = pred_flat
        true_main = true_flat
    pred2d = pred_main.reshape(rows, _LANES)
    true2d = true_main.reshape(rows, _LANES)

    n_main = rows * _LANES
    cost = pl.CostEstimate(
        flops=20 * n_main,
        transcendentals=4 * n_main,
        bytes_accessed=n_main * in_bytes + grid * 8 * _LANES * 4,
    )

    kernel = functools.partial(
        _focal_kernel,
        gamma=gamma,
        alpha=alpha,
        block_rows=block_rows,
        rows_in_last=rows_in_last,
        ragged_last=ragged_last,
    )

    partials = pl.pallas_call(
        kernel,
        out_shape=jax.ShapeDtypeStruct((grid * 8, _LANES), jnp.float32),
        grid_spec=pltpu.PrefetchScalarGridSpec(
            num_scalar_prefetch=0,
            grid=(grid,),
            in_specs=[
                pl.BlockSpec((block_rows, _LANES), lambda i: (i, 0)),
                pl.BlockSpec((block_rows, _LANES), lambda i: (i, 0)),
            ],
            out_specs=pl.BlockSpec((8, _LANES), lambda i: (i, 0)),
        ),
        compiler_params=pltpu.CompilerParams(
            dimension_semantics=("parallel",),
            vmem_limit_bytes=32 * 1024 * 1024,
        ),
        cost_estimate=cost,
    )(pred2d, true2d)

    # Tiny cross-block / cross-lane reduce + mean in the wrapper.
    total = total + jnp.sum(partials)
    return total / jnp.float32(n_elem)
    # TODO(synk): only the default reduction='mean' path of the PyTorch module
    # is implemented ('sum'/'none' would need a different output contract).


def _focal_loss_ref(pred, true, gamma=GAMMA, alpha=ALPHA):
    x = pred.astype(jnp.float32)
    y = true.astype(jnp.float32)
    bce = jnp.maximum(x, 0.0) - x * y + jnp.log1p(jnp.exp(-jnp.abs(x)))
    p = jax.nn.sigmoid(x)
    p_t = y * p + (1.0 - y) * (1.0 - p)
    a_f = y * alpha + (1.0 - y) * (1.0 - alpha)
    return jnp.mean(bce * a_f * (1.0 - p_t) ** gamma)


if __name__ == "__main__":
    key = jax.random.PRNGKey(0)
    k_pred, k_true = jax.random.split(key)

    # NCHW logits and binary-ish targets (YOLOv5 cls/obj targets are in [0,1]).
    shape = (2, 4, 16, 16)
    pred = jax.random.normal(k_pred, shape, dtype=jnp.float32)
    true = (jax.random.uniform(k_true, shape) > 0.5).astype(jnp.float32)

    out = jax.block_until_ready(focal_loss(pred, true))
    ref = _focal_loss_ref(pred, true)
    assert jnp.allclose(out, ref, rtol=1e-5, atol=1e-6), (out, ref)

    # Non-multiple-of-128 size: ragged trailing block + <128-element jnp tail.
    odd = (3, 5, 7, 11)
    pred_o = jax.random.normal(k_pred, odd, dtype=jnp.float32)
    true_o = (jax.random.uniform(k_true, odd) > 0.5).astype(jnp.float32)
    out_o = jax.block_until_ready(focal_loss(pred_o, true_o))
    ref_o = _focal_loss_ref(pred_o, true_o)
    assert jnp.allclose(out_o, ref_o, rtol=1e-5, atol=1e-6), (out_o, ref_o)

    # Multi-block grid with a ragged last block (small override of block_rows).
    med = (2, 3, 40, 40)   # 9600 elems -> 75 rows -> 5 blocks of 16, last has 11
    pred_m = jax.random.normal(k_pred, med, dtype=jnp.float32)
    true_m = (jax.random.uniform(k_true, med) > 0.5).astype(jnp.float32)
    out_m = jax.block_until_ready(focal_loss(pred_m, true_m, block_rows=16))
    ref_m = _focal_loss_ref(pred_m, true_m)
    assert jnp.allclose(out_m, ref_m, rtol=1e-5, atol=1e-6), (out_m, ref_m)

    print("KERNEL_OK")
</pallas_src>

<mosaic_0001>
module attributes {stable_mosaic.version = 11 : i64} {
  func.func @_focal_kernel(%arg0: i32, %arg1: memref<16x128xf32, #tpu.memory_space<vmem>>, %arg2: memref<16x128xf32, #tpu.memory_space<vmem>>, %arg3: memref<8x128xf32, #tpu.memory_space<vmem>>) attributes {dimension_semantics = [#tpu.dimension_semantics<parallel>], iteration_bounds = array<i64: 1>, scalar_prefetch = 0 : i64, scratch_operands = 0 : i64, tpu.core_type = #tpu.core_type<tc>, window_params = [{transform_indices = @transform_0, window_bounds = array<i64: 16, 128>}, {transform_indices = @transform_1, window_bounds = array<i64: 16, 128>}, {transform_indices = @transform_2, window_bounds = array<i64: 8, 128>}]} {
    %c0 = arith.constant 0 : index
    %c0_0 = arith.constant 0 : index
    %0 = vector.load %arg1[%c0, %c0_0] : memref<16x128xf32, #tpu.memory_space<vmem>>, vector<16x128xf32>
    %c0_1 = arith.constant 0 : index
    %c0_2 = arith.constant 0 : index
    %1 = vector.load %arg2[%c0_1, %c0_2] : memref<16x128xf32, #tpu.memory_space<vmem>>, vector<16x128xf32>
    %2 = math.absf %0 : vector<16x128xf32>
    %cst = arith.constant 0.000000e+00 : f32
    %3 = vector.broadcast %cst : f32 to vector<16x128xf32>
    %4 = arith.subf %3, %2 : vector<16x128xf32>
    %5 = math.exp %4 : vector<16x128xf32>
    %cst_3 = arith.constant 0.000000e+00 : f32
    %6 = vector.broadcast %cst_3 : f32 to vector<16x128xf32>
    %7 = arith.maximumf %0, %6 : vector<16x128xf32>
    %8 = arith.mulf %0, %1 : vector<16x128xf32>
    %9 = arith.subf %7, %8 : vector<16x128xf32>
    %10 = math.log1p %5 : vector<16x128xf32>
    %11 = arith.addf %9, %10 : vector<16x128xf32>
    %cst_4 = arith.constant 1.000000e+00 : f32
    %12 = vector.broadcast %cst_4 : f32 to vector<16x128xf32>
    %13 = arith.addf %12, %5 : vector<16x128xf32>
    %14 = tpu.reciprocal %13 {approx = true} : vector<16x128xf32> -> vector<16x128xf32>
    %15 = arith.mulf %13, %14 : vector<16x128xf32>
    %cst_5 = arith.constant 2.000000e+00 : f32
    %16 = vector.broadcast %cst_5 : f32 to vector<16x128xf32>
    %17 = arith.subf %16, %15 : vector<16x128xf32>
    %18 = arith.mulf %14, %17 : vector<16x128xf32>
    %cst_6 = arith.constant 0.000000e+00 : f32
    %19 = vector.broadcast %cst_6 : f32 to vector<16x128xf32>
    %20 = arith.cmpf oge, %0, %19 : vector<16x128xf32>
    %cst_7 = arith.constant 1.000000e+00 : f32
    %21 = vector.broadcast %cst_7 : f32 to vector<16x128xf32>
    %22 = arith.select %20, %21, %5 : vector<16x128xi1>, vector<16x128xf32>
    %23 = arith.mulf %22, %18 : vector<16x128xf32>
    %24 = arith.addf %23, %1 : vector<16x128xf32>
    %25 = arith.mulf %23, %1 : vector<16x128xf32>
    %cst_8 = arith.constant 2.000000e+00 : f32
    %26 = vector.broadcast %cst_8 : f32 to vector<16x128xf32>
    %27 = arith.mulf %26, %25 : vector<16x128xf32>
    %28 = arith.subf %24, %27 : vector<16x128xf32>
    %cst_9 = arith.constant -5.000000e-01 : f32
    %29 = vector.broadcast %cst_9 : f32 to vector<16x128xf32>
    %30 = arith.mulf %1, %29 : vector<16x128xf32>
    %cst_10 = arith.constant 7.500000e-01 : f32
    %31 = vector.broadcast %cst_10 : f32 to vector<16x128xf32>
    %32 = arith.addf %31, %30 : vector<16x128xf32>
    %33 = arith.mulf %11, %32 : vector<16x128xf32>
    %34 = math.sqrt %28 : vector<16x128xf32>
    %35 = arith.mulf %28, %34 : vector<16x128xf32>
    %36 = arith.mulf %33, %35 : vector<16x128xf32>
    %37 = vector.shape_cast %36 : vector<16x128xf32> to vector<2x8x128xf32>
    %cst_11 = arith.constant dense<0.000000e+00> : vector<8x128xf32>
    %38 = vector.multi_reduction <add>, %37, %cst_11 [0] : vector<2x8x128xf32> to vector<8x128xf32>
    %c0_12 = arith.constant 0 : index
    %c0_13 = arith.constant 0 : index
    %39 = vector.load %arg3[%c0_12, %c0_13] : memref<8x128xf32, #tpu.memory_space<vmem>>, vector<8x128xf32>
    tpu.vector_store %arg3[%c0_12, %c0_13], %38 {strides = array<i32>} : memref<8x128xf32, #tpu.memory_space<vmem>>, vector<8x128xf32>,
    return
  }
  func.func @transform_0(%arg0: i32) -> (i32, i32) {
    %c0_i32 = arith.constant 0 : i32
    %c0_i32_0 = arith.constant 0 : i32
    return %arg0, %c0_i32 : i32, i32
  }
  func.func @transform_1(%arg0: i32) -> (i32, i32) {
    %c0_i32 = arith.constant 0 : i32
    %c0_i32_0 = arith.constant 0 : i32
    return %arg0, %c0_i32 : i32, i32
  }
  func.func @transform_2(%arg0: i32) -> (i32, i32) {
    %c0_i32 = arith.constant 0 : i32
    %c0_i32_0 = arith.constant 0 : i32
    return %arg0, %c0_i32 : i32, i32
  }
}

</mosaic_0001>

<llo_original>
// kernel: tpu_custom_call.1
$region0: #{tpu_custom_call.1}
  #allocation0 [shape = 'u32[]', space=smem, size = 0x4, offset = 0x4, fixed_abs, tag = 'smem constant byte address 0x4 - core index']
  #allocation1 [shape = 'u32[144,128]{1,0:T(1,128)}', space=vmem, size = 0x12000, scoped, tag = 'internal scratch']
  %s0 = inlined_call_operand.hbm [shape: f32[16,128], index: 0, kind: input, shape index: {}]
  %s1 = inlined_call_operand.hbm [shape: f32[16,128], index: 1, kind: input, shape index: {}]
  %s2 = inlined_call_operand.hbm [shape: f32[8,128], index: 2, kind: output, shape index: {}]
  %s3 = sld [smem:[#allocation0]]
  $region26: #{tpu_custom_call.1} parent=0
    _
  %s5 = ssub.s32 1, %s3
  %s6 = scalar_select 0, %s5, %s3
  $region1: #{tpu_custom_call.1} parent=0
    #allocation2 [shape = 'u8[8192]{0}', space=vmem, size = 0x2000, scoped, tag = 'input window, operand 0, single buffered']
    #allocation3 [shape = 's32[1]{0}', space=sflag, size = 0x4, scoped, tag = 'scoped memory for tpu_custom_call.1']
    #allocation4 [shape = 's32[1]{0}', space=sflag, size = 0x4, scoped, tag = 'scoped memory for tpu_custom_call.1']
    #allocation5 [shape = 'u8[8192]{0}', space=vmem, size = 0x2000, scoped, tag = 'input window, operand 1, single buffered']
    #allocation6 [shape = 's32[1]{0}', space=sflag, size = 0x4, scoped, tag = 'scoped memory for tpu_custom_call.1']
    #allocation7 [shape = 'u8[4096]{0}', space=vmem, size = 0x1000, scoped, tag = 'output window, operand 0, single buffered']
    %7 = vsyncpa [#allocation3], 0
    %8 = vsyncpa [#allocation6], 0
    %9 = vsyncpa [#allocation4], 0
    // Predicated region
    $region2: #{tpu_custom_call.1} parent=1 // pred_check
      _
    $region3: #{tpu_custom_call.1} parent=1 // pred_check_branch
      %11 = sbr.rel (0) target = $region5
    $region4: #{tpu_custom_call.1} parent=1 // pred_region
      %s13 = ssub.s32 256, 256
      %14 = vsyncadd [#allocation3], %s13
      %s15 = sshll.u32 [#allocation2], 4
      %s16 = int_to_ptr.vmem [resolvable:$true] %s15
      %21 = dma.hbm_to_vmem [thread:$0]  %s0, 256, %s16, [#allocation3], 128, 128, 8
    $region5: #{tpu_custom_call.1} parent=1 // pred_fallthru
      _
    // Predicated region
    $region6: #{tpu_custom_call.1} parent=1 // pred_check
      _
    $region7: #{tpu_custom_call.1} parent=1 // pred_check_branch
      %23 = sbr.rel (0) target = $region9
    $region8: #{tpu_custom_call.1} parent=1 // pred_region
      %s25 = ssub.s32 256, 256
      %26 = vsyncadd [#allocation6], %s25
      %s27 = sshll.u32 [#allocation5], 4
      %s28 = int_to_ptr.vmem [resolvable:$true] %s27
      %33 = dma.hbm_to_vmem [thread:$0]  %s1, 256, %s28, [#allocation6], 128, 128, 8
    $region9: #{tpu_custom_call.1} parent=1 // pred_fallthru
      _
    // Predicated region
    $region10: #{tpu_custom_call.1} parent=1 // pred_check
      _
    $region11: #{tpu_custom_call.1} parent=1 // pred_check_branch
      %35 = sbr.rel (0) target = $region13
    $region12: #{tpu_custom_call.1} parent=1 // pred_region
      %36 = dma.done [#allocation3], 256
    $region13: #{tpu_custom_call.1} parent=1 // pred_fallthru
      _
    // Predicated region
    $region14: #{tpu_custom_call.1} parent=1 // pred_check
      _
    $region15: #{tpu_custom_call.1} parent=1 // pred_check_branch
      %38 = sbr.rel (0) target = $region17
    $region16: #{tpu_custom_call.1} parent=1 // pred_region
      %39 = dma.done [#allocation6], 256
    $region17: #{tpu_custom_call.1} parent=1 // pred_fallthru
      _
    %v40 = vld [vmem:[#allocation2] sm:$0xff]
    %v41 = vld [vmem:[#allocation2 + $0x8] sm:$0xff]
    %v42 = vld [vmem:[#allocation5] sm:$0xff]
    %v43 = vld [vmem:[#allocation5 + $0x8] sm:$0xff]
    %v44 = vand.u32 2147483647, %v40
    %v45 = vand.u32 2147483647, %v41
    %v46 = vsub.f32 0.0, %v44
    %v47 = vsub.f32 0.0, %v45
    %v48 = vmul.f32 %v46, 1.442695
    %v49 = vpow.pop %v48
    %v50 = vmul.f32 %v47, 1.442695
    %v51 = vpow.pop %v50
    %v52 = vmax.f32 %v40, 0.0
    %v53 = vmax.f32 %v41, 0.0
    %v54 = vmul.f32 %v40, %v42
    %v55 = vmul.f32 %v41, %v43
    %v56 = vsub.f32 %v52, %v54
    %v57 = vsub.f32 %v53, %v55
    %v58 = vadd.f32 %v49, 1.0
    %v59 = vlog2.pop %v58
    %v60 = vmul.f32 %v59, 0.6931472
    %v61 = vmul.f32 -0.5, %v49
    %v62 = vadd.f32 %v61, 1.0
    %v63 = vmul.f32 %v62, %v49
    %v64 = vand.u32 2147483647, %v49
    %vm65 = vcmp.lt.f32.partialorder %v64, 0.0004427343
    %v66 = vsel %vm65, %v63, %v60
    %v67 = vadd.f32 %v51, 1.0
    %v68 = vlog2.pop %v67
    %v69 = vmul.f32 %v68, 0.6931472
    %v70 = vmul.f32 -0.5, %v51
    %v71 = vadd.f32 %v70, 1.0
    %v72 = vmul.f32 %v71, %v51
    %v73 = vand.u32 2147483647, %v51
    %vm74 = vcmp.lt.f32.partialorder %v73, 0.0004427343
    %v75 = vsel %vm74, %v72, %v69
    %v76 = vadd.f32 %v56, %v66
    %v77 = vadd.f32 %v57, %v75
    %v78 = vadd.f32 %v49, 1.0
    %v79 = vadd.f32 %v51, 1.0
    %v80 = vrcp.pop %v78
    %v81 = vrcp.pop %v79
    %v82 = vmul.f32 %v78, %v80
    %v83 = vmul.f32 %v79, %v81
    %v84 = vsub.f32 2.0, %v82
    %v85 = vsub.f32 2.0, %v83
    %v86 = vmul.f32 %v80, %v84
    %v87 = vmul.f32 %v81, %v85
    %vm88 = vcmp.ge.f32.partialorder %v40, 0.0
    %vm89 = vcmp.ge.f32.partialorder %v41, 0.0
    %v90 = vsel %vm88, 1.0, %v49
    %v91 = vsel %vm89, 1.0, %v51
    %v92 = vmul.f32 %v90, %v86
    %v93 = vmul.f32 %v91, %v87
    %v94 = vadd.f32 %v92, %v42
    %v95 = vadd.f32 %v93, %v43
    %v96 = vmul.f32 %v92, %v42
    %v97 = vmul.f32 %v93, %v43
    %v98 = vmul.f32 %v96, 2.0
    %v99 = vmul.f32 %v97, 2.0
    %v100 = vsub.f32 %v94, %v98
    %v101 = vsub.f32 %v95, %v99
    %v102 = vmul.f32 %v42, -0.5
    %v103 = vmul.f32 %v43, -0.5
    %v104 = vadd.f32 %v102, 0.75
    %v105 = vadd.f32 %v103, 0.75
    %v106 = vmul.f32 %v76, %v104
    %v107 = vmul.f32 %v77, %v105
    %v108 = vrsqrt.pop %v100
    %v109 = vmul.f32 %v100, %v108
    %vm110 = vcmp.eq.f32.partialorder %v100, inf
    %v111 = vsel %vm110, %v100, %v109
    %vm112 = vcmp.eq.f32.partialorder %v100, 0.0
    %v113 = vand.u32 %v100, 2147483648
    %v114 = vsel %vm112, %v113, %v111
    %v115 = vrsqrt.pop %v101
    %v116 = vmul.f32 %v101, %v115
    %vm117 = vcmp.eq.f32.partialorder %v101, inf
    %v118 = vsel %vm117, %v101, %v116
    %vm119 = vcmp.eq.f32.partialorder %v101, 0.0
    %v120 = vand.u32 %v101, 2147483648
    %v121 = vsel %vm119, %v120, %v118
    %v122 = vmul.f32 %v100, %v114
    %v123 = vmul.f32 %v101, %v121
    %v124 = vmul.f32 %v106, %v122
    %v125 = vmul.f32 %v107, %v123
    %v126 = vadd.f32 %v124, %v125
    %127 = vst [vmem:[#allocation7] sm:$0xff] %v126
    // Predicated region
    $region18: #{tpu_custom_call.1} parent=1 // pred_check
      _
    $region19: #{tpu_custom_call.1} parent=1 // pred_check_branch
      %129 = sbr.rel (0) target = $region21
    $region20: #{tpu_custom_call.1} parent=1 // pred_region
      %s131 = ssub.s32 128, 128
      %132 = vsyncadd [#allocation4], %s131
      %s134 = sshll.u32 [#allocation7], 4
      %s135 = int_to_ptr.vmem [resolvable:$true] %s134
      %137 = dma.vmem_to_hbm [thread:$0]  %s135, 128, %s2, [#allocation4]
    $region21: #{tpu_custom_call.1} parent=1 // pred_fallthru
      _
    // Predicated region
    $region22: #{tpu_custom_call.1} parent=1 // pred_check
      _
    $region23: #{tpu_custom_call.1} parent=1 // pred_check_branch
      %139 = sbr.rel (0) target = $region25
    $region24: #{tpu_custom_call.1} parent=1 // pred_region
      %140 = dma.done [#allocation4], 128
    $region25: #{tpu_custom_call.1} parent=1 // pred_fallthru
      _
    %141 = vsyncpa [#allocation3], 1
    %142 = vsyncpa [#allocation6], 1
    %143 = vsyncpa [#allocation4], 1

</llo_original>
